<compile_context>
chip_gen: v7x
topology: tpu7x:2x2x1
jax: 0.10.0
libtpu: 0.0.40
codegen_flags: <defaults>
</compile_context>

<pallas_src>
import functools

import jax
import jax.numpy as jnp
from jax.experimental import pallas as pl
from jax.experimental.pallas import tpu as pltpu


def _vmem_config():
    """Generation-aware VMEM planning.

    Returns (x_block_budget_bytes, base_vmem_limit_bytes, physical_vmem_bytes).
    """
    try:
        cap = int(pltpu.get_tpu_info().vmem_capacity_bytes)
    except Exception:
        cap = 64 * 1024 * 1024  # conservative (v7x-sized); safe on every generation
    if cap >= 128 * 1024 * 1024:
        # v5e / v6e: 128 MiB physical per TensorCore -> big blocks, raised limit.
        return 24 * 1024 * 1024, 96 * 1024 * 1024, cap
    # v7x: 64 MiB physical per TensorCore (32 MiB scoped default).
    return 10 * 1024 * 1024, 48 * 1024 * 1024, cap


def _pick_tiles(B, D, T, itemsize, x_block_budget):
    """Choose (tb, tt) respecting (8,128)/full-dim rules and the VMEM budget.

    Priorities (per perf review):
      1. largest legal time tile (contiguous DMA run length) given the minimum
         batch tile,
      2. grow the batch tile to fill the budget, but keep >= 2 blocks along the
         parallel B axis when B allows (megacore sharding on v7x),
      3. never silently exceed the budget when a smaller legal time tile exists.
    """
    tb_cands = [c for c in (512, 256, 128, 64, 32, 16, 8) if c <= B and B % c == 0]
    if not tb_cands:
        tb_cands = [B]            # e.g. B == 2: full-B block (legal: equals full dim)
    tb_min = tb_cands[-1]

    tt_cands = [c for c in (16384, 8192, 4096, 2048, 1024, 512, 256, 128)
                if c <= T and T % c == 0]
    tt = None
    for c in tt_cands:            # descending: prefer the biggest time tile
        if tb_min * D * c * itemsize <= x_block_budget:
            tt = c
            break
    if tt is None:
        # Either T has no 128-multiple divisor (must take full T) or even the
        # smallest legal tile busts the budget: take the smallest legal tile
        # rather than silently blowing VMEM with a full-T block.
        tt = tt_cands[-1] if tt_cands else T

    fitting = [c for c in tb_cands if c * D * tt * itemsize <= x_block_budget]
    if not fitting:
        fitting = [tb_min]
    # Prefer >= 2 blocks along the parallel B axis so both v7x cores get work.
    multi = [c for c in fitting if B // c >= 2]
    tb = multi[0] if multi else fitting[0]
    # TODO(synk): for tiny B (grid[0]==1) a per-core split of the T reduction
    # would engage the second v7x core; not done here.
    return tb, tt


def linear_model_kernel(x_ref, wm_ref, wv_ref, b_ref, o_ref,
                        sum_ref, m2_ref, *, t_total, t_block):
    # x_ref:   (tb, D, tt)  -- time on the lane (last) axis
    # wm_ref:  (D, C)  wv_ref: (D, C)  b_ref: (1, C)
    # o_ref:   (tb, C)      -- resident across the T grid axis
    # sum_ref: (tb, D) f32 running sum;  m2_ref: (tb, D) f32 running M2
    ti = pl.program_id(1)

    x = x_ref[...].astype(jnp.float32)                 # (tb, D, tt)
    blk_sum = jnp.sum(x, axis=-1)                      # lane reduce -> (tb, D)
    blk_mean = blk_sum * (1.0 / t_block)               # (tb, D)
    d = x - blk_mean[..., None]                        # shifted by block mean
    blk_m2 = jnp.sum(d * d, axis=-1)                   # (tb, D)

    @pl.when(ti == 0)
    def _first():
        sum_ref[...] = blk_sum
        m2_ref[...] = blk_m2

    @pl.when(ti > 0)
    def _combine():
        # Chan's parallel-variance combination (numerically robust streaming).
        n_a = (ti * t_block).astype(jnp.float32)       # samples already folded in
        n_b = float(t_block)
        s_a = sum_ref[...]
        delta = blk_mean - s_a * (1.0 / n_a)
        m2_ref[...] = (m2_ref[...] + blk_m2
                       + delta * delta * (n_a * n_b / (n_a + n_b)))
        sum_ref[...] = s_a + blk_sum

    @pl.when(ti == pl.num_programs(1) - 1)
    def _finalize():
        mean = sum_ref[...] * (1.0 / t_total)                       # (tb, D)
        # torch.var default: unbiased (T - 1); T == 1 -> nan, matching torch.
        inv_tm1 = (1.0 / (t_total - 1)) if t_total > 1 else float("nan")
        var = m2_ref[...] * inv_tm1                                 # (tb, D)
        out = (jnp.dot(mean, wm_ref[...].astype(jnp.float32),
                       preferred_element_type=jnp.float32)
               + jnp.dot(var, wv_ref[...].astype(jnp.float32),
                         preferred_element_type=jnp.float32)
               + b_ref[...].astype(jnp.float32))
        o_ref[...] = out.astype(o_ref.dtype)


def linear_model_forward(x, w, b, *, tb=None, tt=None):
    """x: (B, 1, D, T); w: (2D, C); b: (C,). Returns (B, C) in x.dtype."""
    x_bdt = jnp.squeeze(x, axis=1)        # (B, D, T): metadata-only, no copy
    B, D, T = x_bdt.shape
    C = w.shape[1]

    # Split the linear weight into mean-half and var-half; avoids an in-kernel
    # lane-axis concat (D is usually not a multiple of 128).
    wm = w[:D, :]                         # (D, C)
    wv = w[D:, :]                         # (D, C)
    b2d = b.reshape(1, C)

    x_itemsize = jnp.dtype(x_bdt.dtype).itemsize
    w_itemsize = jnp.dtype(w.dtype).itemsize
    out_itemsize = x_itemsize

    x_budget, base_limit, vmem_cap = _vmem_config()
    auto_tb, auto_tt = _pick_tiles(B, D, T, x_itemsize, x_budget)
    tb = auto_tb if tb is None else tb
    tt = auto_tt if tt is None else tt
    assert B % tb == 0 and T % tt == 0, "tile sizes must divide (B, T)"
    assert tb == B or tb % 8 == 0, "batch tile must be 8-aligned or full"
    assert tt == T or tt % 128 == 0, "time tile must be 128-aligned or full"

    grid = (B // tb, T // tt)             # (parallel B, arbitrary reduction T)

    # VMEM footprint estimate: double-buffered pipeline buffers + scratch.
    est = (2 * tb * D * tt * x_itemsize            # x blocks
           + 4 * D * C * w_itemsize                # wm + wv blocks
           + 2 * max(C, 128) * w_itemsize          # bias
           + 2 * tb * max(C, 128) * out_itemsize   # output block
           + 2 * tb * D * 4)                       # f32 scratch accumulators
    vmem_limit = int(min(max(base_limit, int(est * 1.25) + (2 << 20)),
                         vmem_cap - (4 << 20)))

    cost = pl.CostEstimate(
        flops=int(5 * B * D * T + 4 * B * D * C),
        transcendentals=0,
        bytes_accessed=int(B * D * T * x_itemsize
                           + 2 * D * C * w_itemsize
                           + B * C * out_itemsize),
    )

    kernel = functools.partial(linear_model_kernel, t_total=T, t_block=tt)

    return pl.pallas_call(
        kernel,
        out_shape=jax.ShapeDtypeStruct((B, C), x.dtype),
        grid_spec=pltpu.PrefetchScalarGridSpec(
            num_scalar_prefetch=0,
            grid=grid,
            in_specs=[
                pl.BlockSpec((tb, D, tt), lambda bi, ti: (bi, 0, ti)),
                pl.BlockSpec((D, C), lambda bi, ti: (0, 0)),
                pl.BlockSpec((D, C), lambda bi, ti: (0, 0)),
                pl.BlockSpec((1, C), lambda bi, ti: (0, 0)),
            ],
            out_specs=pl.BlockSpec((tb, C), lambda bi, ti: (bi, 0)),
            scratch_shapes=[
                pltpu.VMEM((tb, D), jnp.float32),   # running sum
                pltpu.VMEM((tb, D), jnp.float32),   # running M2 (sum sq deviations)
            ],
        ),
        compiler_params=pltpu.CompilerParams(
            dimension_semantics=("parallel", "arbitrary"),
            vmem_limit_bytes=vmem_limit,
        ),
        cost_estimate=cost,
    )(x_bdt, wm, wv, b2d)


def _reference(x, w, b):
    x_btd = jnp.transpose(jnp.squeeze(x, axis=1), (0, 2, 1))
    mean = jnp.mean(x_btd, axis=1)
    var = jnp.var(x_btd, axis=1, ddof=1)
    feat = jnp.concatenate([mean, var], axis=1)
    return feat @ w + b


if __name__ == "__main__":
    key = jax.random.PRNGKey(0)
    kx, kw, kb, kx2 = jax.random.split(key, 4)

    # Small shapes consistent with the module: B=2, D(input_dim)=32, T(seq)=8, C=3.
    B, D, T, C = 2, 32, 8, 3
    x = jax.random.normal(kx, (B, 1, D, T), dtype=jnp.float32)

    # Deterministic parameter init (PyTorch nn.Linear-style uniform bound).
    bound = 1.0 / jnp.sqrt(2.0 * D)
    w = jax.random.uniform(kw, (2 * D, C), minval=-bound, maxval=bound,
                           dtype=jnp.float32)
    b = jax.random.uniform(kb, (C,), minval=-bound, maxval=bound,
                           dtype=jnp.float32)

    out = jax.block_until_ready(linear_model_forward(x, w, b))
    ref = _reference(x, w, b)
    assert out.shape == (B, C)
    assert jnp.allclose(out, ref, atol=1e-4, rtol=1e-4)

    # Exercise the tiled / accumulating grid path (multiple B and T blocks,
    # streaming Chan combination across T blocks).
    B2, T2 = 16, 256
    x2 = jax.random.normal(kx2, (B2, 1, D, T2), dtype=jnp.float32)
    out2 = jax.block_until_ready(linear_model_forward(x2, w, b, tb=8, tt=128))
    ref2 = _reference(x2, w, b)
    assert out2.shape == (B2, C)
    assert jnp.allclose(out2, ref2, atol=1e-4, rtol=1e-4)

    # bf16 input path (halves HBM traffic; accumulation stays f32 in-kernel).
    x3 = x2.astype(jnp.bfloat16)
    out3 = jax.block_until_ready(linear_model_forward(x3, w, b))
    ref3 = _reference(x3.astype(jnp.float32), w, b)
    assert out3.dtype == jnp.bfloat16
    assert jnp.allclose(out3.astype(jnp.float32), ref3, atol=3e-2, rtol=3e-2)

    print("KERNEL_OK")
</pallas_src>

<mosaic_0001>
module attributes {stable_mosaic.version = 11 : i64} {
  func.func @linear_model_kernel(%arg0: i32, %arg1: i32, %arg2: memref<2x32x8xf32, #tpu.memory_space<vmem>>, %arg3: memref<32x3xf32, #tpu.memory_space<vmem>>, %arg4: memref<32x3xf32, #tpu.memory_space<vmem>>, %arg5: memref<1x3xf32, #tpu.memory_space<vmem>>, %arg6: memref<2x3xf32, #tpu.memory_space<vmem>>, %arg7: memref<2x32xf32, #tpu.memory_space<vmem>>, %arg8: memref<2x32xf32, #tpu.memory_space<vmem>>) attributes {dimension_semantics = [#tpu.dimension_semantics<parallel>, #tpu.dimension_semantics<arbitrary>], iteration_bounds = array<i64: 1, 1>, scalar_prefetch = 0 : i64, scratch_operands = 2 : i64, tpu.core_type = #tpu.core_type<tc>, window_params = [{transform_indices = @transform_0, window_bounds = array<i64: 2, 32, 8>}, {pipeline_mode = #tpu.pipeline_mode<synchronous>, transform_indices = @transform_1, window_bounds = array<i64: 32, 3>}, {pipeline_mode = #tpu.pipeline_mode<synchronous>, transform_indices = @transform_2, window_bounds = array<i64: 32, 3>}, {pipeline_mode = #tpu.pipeline_mode<synchronous>, transform_indices = @transform_3, window_bounds = array<i64: 1, 3>}, {transform_indices = @transform_4, window_bounds = array<i64: 2, 3>}]} {
    %c0 = arith.constant 0 : index
    %c0_0 = arith.constant 0 : index
    %c0_1 = arith.constant 0 : index
    %0 = vector.load %arg2[%c0, %c0_0, %c0_1] : memref<2x32x8xf32, #tpu.memory_space<vmem>>, vector<2x32x8xf32>
    %cst = arith.constant dense<0.000000e+00> : vector<2x32xf32>
    %1 = vector.multi_reduction <add>, %0, %cst [2] : vector<2x32x8xf32> to vector<2x32xf32>
    %cst_2 = arith.constant 1.250000e-01 : f32
    %2 = vector.broadcast %cst_2 : f32 to vector<2x32xf32>
    %3 = arith.mulf %1, %2 : vector<2x32xf32>
    %4 = vector.shape_cast %3 : vector<2x32xf32> to vector<2x32x1xf32>
    %5 = vector.broadcast %4 : vector<2x32x1xf32> to vector<2x32x8xf32>
    %6 = arith.subf %0, %5 : vector<2x32x8xf32>
    %7 = arith.mulf %6, %6 : vector<2x32x8xf32>
    %cst_3 = arith.constant dense<0.000000e+00> : vector<2x32xf32>
    %8 = vector.multi_reduction <add>, %7, %cst_3 [2] : vector<2x32x8xf32> to vector<2x32xf32>
    %c0_i32 = arith.constant 0 : i32
    %9 = arith.cmpi eq, %arg1, %c0_i32 : i32
    %10 = arith.extui %9 : i1 to i32
    %c0_i32_4 = arith.constant 0 : i32
    %11 = arith.cmpi ne, %10, %c0_i32_4 : i32
    scf.if %11 {
      %c0_9 = arith.constant 0 : index
      %c0_10 = arith.constant 0 : index
      %18 = vector.load %arg7[%c0_9, %c0_10] : memref<2x32xf32, #tpu.memory_space<vmem>>, vector<2x32xf32>
      tpu.vector_store %arg7[%c0_9, %c0_10], %1 {strides = array<i32>} : memref<2x32xf32, #tpu.memory_space<vmem>>, vector<2x32xf32>,
      %c0_11 = arith.constant 0 : index
      %c0_12 = arith.constant 0 : index
      %19 = vector.load %arg8[%c0_11, %c0_12] : memref<2x32xf32, #tpu.memory_space<vmem>>, vector<2x32xf32>
      tpu.vector_store %arg8[%c0_11, %c0_12], %8 {strides = array<i32>} : memref<2x32xf32, #tpu.memory_space<vmem>>, vector<2x32xf32>,
    } else {
    }
    %c0_i32_5 = arith.constant 0 : i32
    %12 = arith.cmpi sgt, %arg1, %c0_i32_5 : i32
    %13 = arith.extui %12 : i1 to i32
    %c0_i32_6 = arith.constant 0 : i32
    %14 = arith.cmpi ne, %13, %c0_i32_6 : i32
    scf.if %14 {
      %c8_i32 = arith.constant 8 : i32
      %18 = arith.muli %arg1, %c8_i32 : i32
      %19 = arith.sitofp %18 : i32 to f32
      %c0_9 = arith.constant 0 : index
      %c0_10 = arith.constant 0 : index
      %20 = vector.load %arg7[%c0_9, %c0_10] : memref<2x32xf32, #tpu.memory_space<vmem>>, vector<2x32xf32>
      %cst_11 = arith.constant 1.000000e+00 : f32
      %21 = arith.divf %cst_11, %19 : f32
      %22 = vector.broadcast %21 : f32 to vector<2x32xf32>
      %23 = arith.mulf %20, %22 : vector<2x32xf32>
      %24 = arith.subf %3, %23 : vector<2x32xf32>
      %c0_12 = arith.constant 0 : index
      %c0_13 = arith.constant 0 : index
      %25 = vector.load %arg8[%c0_12, %c0_13] : memref<2x32xf32, #tpu.memory_space<vmem>>, vector<2x32xf32>
      %26 = arith.addf %25, %8 : vector<2x32xf32>
      %27 = arith.mulf %24, %24 : vector<2x32xf32>
      %cst_14 = arith.constant 8.000000e+00 : f32
      %28 = arith.mulf %19, %cst_14 : f32
      %cst_15 = arith.constant 8.000000e+00 : f32
      %29 = arith.addf %19, %cst_15 : f32
      %30 = arith.divf %28, %29 : f32
      %31 = vector.broadcast %30 : f32 to vector<2x32xf32>
      %32 = arith.mulf %27, %31 : vector<2x32xf32>
      %33 = arith.addf %26, %32 : vector<2x32xf32>
      %c0_16 = arith.constant 0 : index
      %c0_17 = arith.constant 0 : index
      %34 = vector.load %arg8[%c0_16, %c0_17] : memref<2x32xf32, #tpu.memory_space<vmem>>, vector<2x32xf32>
      tpu.vector_store %arg8[%c0_16, %c0_17], %33 {strides = array<i32>} : memref<2x32xf32, #tpu.memory_space<vmem>>, vector<2x32xf32>,
      %35 = arith.addf %20, %1 : vector<2x32xf32>
      %c0_18 = arith.constant 0 : index
      %c0_19 = arith.constant 0 : index
      %36 = vector.load %arg7[%c0_18, %c0_19] : memref<2x32xf32, #tpu.memory_space<vmem>>, vector<2x32xf32>
      tpu.vector_store %arg7[%c0_18, %c0_19], %35 {strides = array<i32>} : memref<2x32xf32, #tpu.memory_space<vmem>>, vector<2x32xf32>,
    } else {
    }
    %c0_i32_7 = arith.constant 0 : i32
    %15 = arith.cmpi eq, %arg1, %c0_i32_7 : i32
    %16 = arith.extui %15 : i1 to i32
    %c0_i32_8 = arith.constant 0 : i32
    %17 = arith.cmpi ne, %16, %c0_i32_8 : i32
    scf.if %17 {
      %c0_9 = arith.constant 0 : index
      %c0_10 = arith.constant 0 : index
      %18 = vector.load %arg7[%c0_9, %c0_10] : memref<2x32xf32, #tpu.memory_space<vmem>>, vector<2x32xf32>
      %cst_11 = arith.constant 1.250000e-01 : f32
      %19 = vector.broadcast %cst_11 : f32 to vector<2x32xf32>
      %20 = arith.mulf %18, %19 : vector<2x32xf32>
      %c0_12 = arith.constant 0 : index
      %c0_13 = arith.constant 0 : index
      %21 = vector.load %arg8[%c0_12, %c0_13] : memref<2x32xf32, #tpu.memory_space<vmem>>, vector<2x32xf32>
      %cst_14 = arith.constant 0.142857149 : f32
      %22 = vector.broadcast %cst_14 : f32 to vector<2x32xf32>
      %23 = arith.mulf %21, %22 : vector<2x32xf32>
      %c0_15 = arith.constant 0 : index
      %c0_16 = arith.constant 0 : index
      %24 = vector.load %arg3[%c0_15, %c0_16] : memref<32x3xf32, #tpu.memory_space<vmem>>, vector<32x3xf32>
      %cst_17 = arith.constant dense<0.000000e+00> : vector<2x3xf32>
      %25 = tpu.matmul %20, %24, %cst_17 {dimension_numbers = #tpu.dot_dimension_numbers<[1], [0], [0], [1], [0, 0, 1, 1], [], []>} : vector<2x32xf32>, vector<32x3xf32>, vector<2x3xf32> -> vector<2x3xf32>
      %c0_18 = arith.constant 0 : index
      %c0_19 = arith.constant 0 : index
      %26 = vector.load %arg4[%c0_18, %c0_19] : memref<32x3xf32, #tpu.memory_space<vmem>>, vector<32x3xf32>
      %cst_20 = arith.constant dense<0.000000e+00> : vector<2x3xf32>
      %27 = tpu.matmul %23, %26, %cst_20 {dimension_numbers = #tpu.dot_dimension_numbers<[1], [0], [0], [1], [0, 0, 1, 1], [], []>} : vector<2x32xf32>, vector<32x3xf32>, vector<2x3xf32> -> vector<2x3xf32>
      %28 = arith.addf %25, %27 : vector<2x3xf32>
      %c0_21 = arith.constant 0 : index
      %c0_22 = arith.constant 0 : index
      %29 = vector.load %arg5[%c0_21, %c0_22] : memref<1x3xf32, #tpu.memory_space<vmem>>, vector<1x3xf32>
      %30 = vector.broadcast %29 : vector<1x3xf32> to vector<2x3xf32>
      %31 = arith.addf %28, %30 : vector<2x3xf32>
      %c0_23 = arith.constant 0 : index
      %c0_24 = arith.constant 0 : index
      %32 = vector.load %arg6[%c0_23, %c0_24] : memref<2x3xf32, #tpu.memory_space<vmem>>, vector<2x3xf32>
      tpu.vector_store %arg6[%c0_23, %c0_24], %31 {strides = array<i32>} : memref<2x3xf32, #tpu.memory_space<vmem>>, vector<2x3xf32>,
    } else {
    }
    return
  }
  func.func @transform_0(%arg0: i32, %arg1: i32) -> (i32, i32, i32) {
    %c0_i32 = arith.constant 0 : i32
    %c0_i32_0 = arith.constant 0 : i32
    return %arg0, %c0_i32, %arg1 : i32, i32, i32
  }
  func.func @transform_1(%arg0: i32, %arg1: i32) -> (i32, i32) {
    %c0_i32 = arith.constant 0 : i32
    %c0_i32_0 = arith.constant 0 : i32
    %c0_i32_1 = arith.constant 0 : i32
    return %c0_i32, %c0_i32_0 : i32, i32
  }
  func.func @transform_2(%arg0: i32, %arg1: i32) -> (i32, i32) {
    %c0_i32 = arith.constant 0 : i32
    %c0_i32_0 = arith.constant 0 : i32
    %c0_i32_1 = arith.constant 0 : i32
    return %c0_i32, %c0_i32_0 : i32, i32
  }
  func.func @transform_3(%arg0: i32, %arg1: i32) -> (i32, i32) {
    %c0_i32 = arith.constant 0 : i32
    %c0_i32_0 = arith.constant 0 : i32
    %c0_i32_1 = arith.constant 0 : i32
    return %c0_i32, %c0_i32_0 : i32, i32
  }
  func.func @transform_4(%arg0: i32, %arg1: i32) -> (i32, i32) {
    %c0_i32 = arith.constant 0 : i32
    %c0_i32_0 = arith.constant 0 : i32
    return %arg0, %c0_i32 : i32, i32
  }
}

</mosaic_0001>

<llo_original>
// kernel: tpu_custom_call.1
$region0: #{tpu_custom_call.1}
  #allocation0 [shape = 'u32[]', space=smem, size = 0x4, offset = 0x4, fixed_abs, tag = 'smem constant byte address 0x4 - core index']
  #allocation1 [shape = 'u32[144,128]{1,0:T(1,128)}', space=vmem, size = 0x12000, scoped, tag = 'internal scratch']
  #allocation2 [shape = 'f32[2,32]{1,0:T(2,128)}', space=vmem, size = 0x400, scoped, tag = 'scratch operand']
  #allocation3 [shape = 'f32[2,32]{1,0:T(2,128)}', space=vmem, size = 0x400, scoped, tag = 'scratch operand']
  %s0 = inlined_call_operand.vmem [shape: f32[2,32,8], index: 0, kind: input, shape index: {}]
  %s1 = inlined_call_operand.vmem [shape: f32[32,3], index: 1, kind: input, shape index: {}]
  %s2 = inlined_call_operand.vmem [shape: f32[32,3], index: 2, kind: input, shape index: {}]
  %s3 = inlined_call_operand.vmem [shape: f32[1,3], index: 3, kind: input, shape index: {}]
  %s4 = inlined_call_operand.hbm [shape: f32[2,3], index: 4, kind: output, shape index: {}]
  %s5 = sld [smem:[#allocation0]]
  $region38: #{tpu_custom_call.1} parent=0
    _
  %s7 = ssub.s32 1, %s5
  %s8 = scalar_select 0, %s7, %s5
  $region1: #{tpu_custom_call.1} parent=0
    #allocation4 [shape = 'u8[1024]{0}', space=vmem, size = 0x400, scoped, tag = 'output window, operand 0, single buffered']
    #allocation5 [shape = 's32[1]{0}', space=sflag, size = 0x4, scoped, tag = 'scoped memory for tpu_custom_call.1']
    %9 = vsyncpa [#allocation5], 0
    // Predicated region
    $region2: #{tpu_custom_call.1} parent=1 // pred_check
      _
    $region3: #{tpu_custom_call.1} parent=1 // pred_check_branch
      %11 = sbr.rel (0) target = $region5
    $region4: #{tpu_custom_call.1} parent=1 // pred_region
      _
    $region5: #{tpu_custom_call.1} parent=1 // pred_fallthru
      _
    // Predicated region
    $region6: #{tpu_custom_call.1} parent=1 // pred_check
      _
    $region7: #{tpu_custom_call.1} parent=1 // pred_check_branch
      %13 = sbr.rel (0) target = $region9
    $region8: #{tpu_custom_call.1} parent=1 // pred_region
      _
    $region9: #{tpu_custom_call.1} parent=1 // pred_fallthru
      _
    // Predicated region
    $region10: #{tpu_custom_call.1} parent=1 // pred_check
      _
    $region11: #{tpu_custom_call.1} parent=1 // pred_check_branch
      %15 = sbr.rel (0) target = $region13
    $region12: #{tpu_custom_call.1} parent=1 // pred_region
      _
    $region13: #{tpu_custom_call.1} parent=1 // pred_fallthru
      _
    // Predicated region
    $region14: #{tpu_custom_call.1} parent=1 // pred_check
      _
    $region15: #{tpu_custom_call.1} parent=1 // pred_check_branch
      %17 = sbr.rel (0) target = $region17
    $region16: #{tpu_custom_call.1} parent=1 // pred_region
      _
    $region17: #{tpu_custom_call.1} parent=1 // pred_fallthru
      _
    %v18 = vld [vmem:[%s0] sm:$0xff]
    %v19 = vld [vmem:[%s0 + $0x8] sm:$0xff]
    %v20 = vld [vmem:[%s0 + $0x10] sm:$0xff]
    %v21 = vld [vmem:[%s0 + $0x18] sm:$0xff]
    %v22 = vld [vmem:[%s0 + $0x20] sm:$0xff]
    %v23 = vld [vmem:[%s0 + $0x28] sm:$0xff]
    %v24 = vld [vmem:[%s0 + $0x30] sm:$0xff]
    %v25 = vld [vmem:[%s0 + $0x38] sm:$0xff]
    %vm26 = vcmask 64512
    %v27 = vsel %vm26, %v18, 0.0
    %28 = vadd.xlane.f32.xlu0 %v27
    %v29 = vpop.xlane.xlu0 %28
    %v30 = vsel %vm26, %v19, 0.0
    %31 = vadd.xlane.f32.xlu0 %v30
    %v32 = vpop.xlane.xlu0 %31
    %v33 = vsel %vm26, %v20, 0.0
    %34 = vadd.xlane.f32.xlu0 %v33
    %v35 = vpop.xlane.xlu0 %34
    %v36 = vsel %vm26, %v21, 0.0
    %37 = vadd.xlane.f32.xlu0 %v36
    %v38 = vpop.xlane.xlu0 %37
    %v39 = vsel %vm26, %v22, 0.0
    %40 = vadd.xlane.f32.xlu0 %v39
    %v41 = vpop.xlane.xlu0 %40
    %v42 = vsel %vm26, %v23, 0.0
    %43 = vadd.xlane.f32.xlu0 %v42
    %v44 = vpop.xlane.xlu0 %43
    %v45 = vsel %vm26, %v24, 0.0
    %46 = vadd.xlane.f32.xlu0 %v45
    %v47 = vpop.xlane.xlu0 %46
    %v48 = vsel %vm26, %v25, 0.0
    %49 = vadd.xlane.f32.xlu0 %v48
    %v50 = vpop.xlane.xlu0 %49
    %v51 = vmul.f32 %v29, 0.125
    %v52 = vmul.f32 %v32, 0.125
    %v53 = vmul.f32 %v35, 0.125
    %v54 = vmul.f32 %v38, 0.125
    %v55 = vmul.f32 %v41, 0.125
    %v56 = vmul.f32 %v44, 0.125
    %v57 = vmul.f32 %v47, 0.125
    %v58 = vmul.f32 %v50, 0.125
    %v59 = vsub.f32 %v18, %v51
    %v60 = vsub.f32 %v19, %v52
    %v61 = vsub.f32 %v20, %v53
    %v62 = vsub.f32 %v21, %v54
    %v63 = vsub.f32 %v22, %v55
    %v64 = vsub.f32 %v23, %v56
    %v65 = vsub.f32 %v24, %v57
    %v66 = vsub.f32 %v25, %v58
    %v67 = vmul.f32 %v59, %v59
    %v68 = vmul.f32 %v60, %v60
    %v69 = vmul.f32 %v61, %v61
    %v70 = vmul.f32 %v62, %v62
    %v71 = vmul.f32 %v63, %v63
    %v72 = vmul.f32 %v64, %v64
    %v73 = vmul.f32 %v65, %v65
    %v74 = vmul.f32 %v66, %v66
    %v75 = vsel %vm26, %v67, 0.0
    %76 = vadd.xlane.f32.xlu0 %v75
    %v77 = vpop.xlane.xlu0 %76
    %v78 = vsel %vm26, %v68, 0.0
    %79 = vadd.xlane.f32.xlu0 %v78
    %v80 = vpop.xlane.xlu0 %79
    %v81 = vsel %vm26, %v69, 0.0
    %82 = vadd.xlane.f32.xlu0 %v81
    %v83 = vpop.xlane.xlu0 %82
    %v84 = vsel %vm26, %v70, 0.0
    %85 = vadd.xlane.f32.xlu0 %v84
    %v86 = vpop.xlane.xlu0 %85
    %v87 = vsel %vm26, %v71, 0.0
    %88 = vadd.xlane.f32.xlu0 %v87
    %v89 = vpop.xlane.xlu0 %88
    %v90 = vsel %vm26, %v72, 0.0
    %91 = vadd.xlane.f32.xlu0 %v90
    %v92 = vpop.xlane.xlu0 %91
    %v93 = vsel %vm26, %v73, 0.0
    %94 = vadd.xlane.f32.xlu0 %v93
    %v95 = vpop.xlane.xlu0 %94
    %v96 = vsel %vm26, %v74, 0.0
    %97 = vadd.xlane.f32.xlu0 %v96
    %v98 = vpop.xlane.xlu0 %97
    %p99 = scmp.eq.s32.totalorder 0, 0
    // Predicated region
    $region18: #{tpu_custom_call.1} parent=1 // pred_check
      %p100 = pneg %p99
    $region19: #{tpu_custom_call.1} parent=1 // pred_check_branch
      %102 = sbr.rel (%p100) target = $region21
    $region20: #{tpu_custom_call.1} parent=1 // pred_region
      %v111 = vlaneseq
      %v112 = vand.u32 %v111, 127
      %v113 = vlaneseq
      %v114 = vshrl.u32 %v113, 7
      %v115 = vsub.s32 %v112, %v114
      %v116 = vrot.slane %v29, %v115
      %v117 = vadd.s32 %v112, 4294967288
      %v118 = vlaneseq
      %v119 = vshrl.u32 %v118, 7
      %v120 = vsub.s32 %v117, %v119
      %v121 = vrot.slane %v32, %v120
      %vm122 = vcmask 130112
      %v123 = vsel %vm122, %v121, %v116
      %v124 = vadd.s32 %v112, 4294967280
      %v125 = vlaneseq
      %v126 = vshrl.u32 %v125, 7
      %v127 = vsub.s32 %v124, %v126
      %v128 = vrot.slane %v35, %v127
      %vm129 = vcmask 195712
      %v130 = vsel %vm129, %v128, %v123
      %v131 = vadd.s32 %v112, 4294967272
      %v132 = vlaneseq
      %v133 = vshrl.u32 %v132, 7
      %v134 = vsub.s32 %v131, %v133
      %v135 = vrot.slane %v38, %v134
      %vm136 = vcmask 261312
      %v137 = vsel %vm136, %v135, %v130
      %v138 = vlaneseq
      %v139 = vshrl.u32 %v138, 7
      %v140 = vsub.s32 %v112, %v139
      %v141 = vrot.slane %v41, %v140
      %v142 = vlaneseq
      %v143 = vshrl.u32 %v142, 7
      %v144 = vsub.s32 %v117, %v143
      %v145 = vrot.slane %v44, %v144
      %v146 = vsel %vm122, %v145, %v141
      %v147 = vlaneseq
      %v148 = vshrl.u32 %v147, 7
      %v149 = vsub.s32 %v124, %v148
      %v150 = vrot.slane %v47, %v149
      %v151 = vsel %vm129, %v150, %v146
      %v152 = vlaneseq
      %v153 = vshrl.u32 %v152, 7
      %v154 = vsub.s32 %v131, %v153
      %v155 = vrot.slane %v50, %v154
      %v156 = vsel %vm136, %v155, %v151
      %vm157 = vcmask 1041409
      %v158 = vsel %vm157, %v156, %v137
      %vm160 = vcmask 254976
      %161 = vst.msk [vmem:[#allocation2] sm:$0x3] %vm160, %v158
      %v170 = vlaneseq
      %v171 = vshrl.u32 %v170, 7
      %v172 = vsub.s32 %v112, %v171
      %v173 = vrot.slane %v77, %v172
      %v174 = vlaneseq
      %v175 = vshrl.u32 %v174, 7
      %v176 = vsub.s32 %v117, %v175
      %v177 = vrot.slane %v80, %v176
      %v178 = vsel %vm122, %v177, %v173
      %v179 = vlaneseq
      %v180 = vshrl.u32 %v179, 7
      %v181 = vsub.s32 %v124, %v180
      %v182 = vrot.slane %v83, %v181
      %v183 = vsel %vm129, %v182, %v178
      %v184 = vlaneseq
      %v185 = vshrl.u32 %v184, 7
      %v186 = vsub.s32 %v131, %v185
      %v187 = vrot.slane %v86, %v186
      %v188 = vsel %vm136, %v187, %v183
      %v189 = vlaneseq
      %v190 = vshrl.u32 %v189, 7
      %v191 = vsub.s32 %v112, %v190
      %v192 = vrot.slane %v89, %v191
      %v193 = vlaneseq
      %v194 = vshrl.u32 %v193, 7
      %v195 = vsub.s32 %v117, %v194
      %v196 = vrot.slane %v92, %v195
      %v197 = vsel %vm122, %v196, %v192
      %v198 = vlaneseq
      %v199 = vshrl.u32 %v198, 7
      %v200 = vsub.s32 %v124, %v199
      %v201 = vrot.slane %v95, %v200
      %v202 = vsel %vm129, %v201, %v197
      %v203 = vlaneseq
      %v204 = vshrl.u32 %v203, 7
      %v205 = vsub.s32 %v131, %v204
      %v206 = vrot.slane %v98, %v205
      %v207 = vsel %vm136, %v206, %v202
      %v208 = vsel %vm157, %v207, %v188
      %210 = vst.msk [vmem:[#allocation3] sm:$0x3] %vm160, %v208
    $region21: #{tpu_custom_call.1} parent=1 // pred_fallthru
      _
    %p211 = scmp.gt.s32.totalorder 0, 0
    // Predicated region
    $region22: #{tpu_custom_call.1} parent=1 // pred_check
      %p212 = pneg %p211
    $region23: #{tpu_custom_call.1} parent=1 // pred_check_branch
      %214 = sbr.rel (%p212) target = $region25
    $region24: #{tpu_custom_call.1} parent=1 // pred_region
      %s215 = smul.u32 0, 8
      %s216 = scvt.s32.f32 %s215
      %v217 = vld [vmem:[#allocation2] sm:$0x3]
      %v218 = vstv %s216
      %v219 = vrcp.pop %v218
      %s220 = vtos %v219
      %v221 = vstv %s220
      %v222 = vmul.f32 %v217, %v221
      %v224 = vlaneseq
      %v225 = vshrl.u32 %v224, 7
      %v226 = vsub.s32 0, %v225
      %v227 = vrot.slane %v222, %v226
      %229 = vbcast.lane.b32.xlu0 %v227, 256
      %v230 = vpop.permute.xlu0 %229
      %s232 = sor.u32 256, 8
      %233 = vbcast.lane.b32.xlu0 %v227, %s232
      %v234 = vpop.permute.xlu0 %233
      %s236 = sor.u32 256, 16
      %237 = vbcast.lane.b32.xlu0 %v227, %s236
      %v238 = vpop.permute.xlu0 %237
      %s240 = sor.u32 256, 24
      %241 = vbcast.lane.b32.xlu0 %v227, %s240
      %v242 = vpop.permute.xlu0 %241
      %v243 = vlaneseq
      %v244 = vshrl.u32 %v243, 7
      %v245 = vsub.s32 1, %v244
      %v246 = vrot.slane %v222, %v245
      %248 = vbcast.lane.b32.xlu0 %v246, 256
      %v249 = vpop.permute.xlu0 %248
      %s251 = sor.u32 256, 8
      %252 = vbcast.lane.b32.xlu0 %v246, %s251
      %v253 = vpop.permute.xlu0 %252
      %s255 = sor.u32 256, 16
      %256 = vbcast.lane.b32.xlu0 %v246, %s255
      %v257 = vpop.permute.xlu0 %256
      %s259 = sor.u32 256, 24
      %260 = vbcast.lane.b32.xlu0 %v246, %s259
      %v261 = vpop.permute.xlu0 %260
      %v270 = vsub.f32 %v51, %v230
      %v271 = vsub.f32 %v52, %v234
      %v272 = vsub.f32 %v53, %v238
      %v273 = vsub.f32 %v54, %v242
      %v274 = vsub.f32 %v55, %v249
      %v275 = vsub.f32 %v56, %v253
      %v276 = vsub.f32 %v57, %v257
      %v277 = vsub.f32 %v58, %v261
      %v278 = vld [vmem:[#allocation3] sm:$0x3]
      %v287 = vlaneseq
      %v288 = vand.u32 %v287, 127
      %v289 = vlaneseq
      %v290 = vshrl.u32 %v289, 7
      %v291 = vsub.s32 %v288, %v290
      %v292 = vrot.slane %v77, %v291
      %v293 = vadd.s32 %v288, 4294967288
      %v294 = vlaneseq
      %v295 = vshrl.u32 %v294, 7
      %v296 = vsub.s32 %v293, %v295
      %v297 = vrot.slane %v80, %v296
      %vm298 = vcmask 130112
      %v299 = vsel %vm298, %v297, %v292
      %v300 = vadd.s32 %v288, 4294967280
      %v301 = vlaneseq
      %v302 = vshrl.u32 %v301, 7
      %v303 = vsub.s32 %v300, %v302
      %v304 = vrot.slane %v83, %v303
      %vm305 = vcmask 195712
      %v306 = vsel %vm305, %v304, %v299
      %v307 = vadd.s32 %v288, 4294967272
      %v308 = vlaneseq
      %v309 = vshrl.u32 %v308, 7
      %v310 = vsub.s32 %v307, %v309
      %v311 = vrot.slane %v86, %v310
      %vm312 = vcmask 261312
      %v313 = vsel %vm312, %v311, %v306
      %v314 = vlaneseq
      %v315 = vshrl.u32 %v314, 7
      %v316 = vsub.s32 %v288, %v315
      %v317 = vrot.slane %v89, %v316
      %v318 = vlaneseq
      %v319 = vshrl.u32 %v318, 7
      %v320 = vsub.s32 %v293, %v319
      %v321 = vrot.slane %v92, %v320
      %v322 = vsel %vm298, %v321, %v317
      %v323 = vlaneseq
      %v324 = vshrl.u32 %v323, 7
      %v325 = vsub.s32 %v300, %v324
      %v326 = vrot.slane %v95, %v325
      %v327 = vsel %vm305, %v326, %v322
      %v328 = vlaneseq
      %v329 = vshrl.u32 %v328, 7
      %v330 = vsub.s32 %v307, %v329
      %v331 = vrot.slane %v98, %v330
      %v332 = vsel %vm312, %v331, %v327
      %vm333 = vcmask 1041409
      %v334 = vsel %vm333, %v332, %v313
      %v336 = vadd.f32 %v278, %v334
      %v337 = vmul.f32 %v270, %v270
      %v338 = vmul.f32 %v271, %v271
      %v339 = vmul.f32 %v272, %v272
      %v340 = vmul.f32 %v273, %v273
      %v341 = vmul.f32 %v274, %v274
      %v342 = vmul.f32 %v275, %v275
      %v343 = vmul.f32 %v276, %v276
      %v344 = vmul.f32 %v277, %v277
      %s345 = smul.f32 %s216, 8.0
      %s346 = sadd.f32 %s216, 8.0
      %v347 = vstv %s346
      %v348 = vrcp.pop %v347
      %s349 = vtos %v348
      %s350 = smul.f32 %s345, %s349
      %v351 = vstv %s350
      %v352 = vmul.f32 %v337, %v351
      %v353 = vmul.f32 %v338, %v351
      %v354 = vmul.f32 %v339, %v351
      %v355 = vmul.f32 %v340, %v351
      %v356 = vmul.f32 %v341, %v351
      %v357 = vmul.f32 %v342, %v351
      %v358 = vmul.f32 %v343, %v351
      %v359 = vmul.f32 %v344, %v351
      %368 = vset.pattern.permute.xlu0 0
      %369 = vperm.xlu0 %368, %v352
      %v370 = vpop.permute.xlu0 %369
      %371 = vset.pattern.permute.xlu0 0
      %372 = vperm.xlu0 %371, %v353
      %v373 = vpop.permute.xlu0 %372
      %374 = vset.pattern.permute.xlu0 0
      %375 = vperm.xlu0 %374, %v354
      %v376 = vpop.permute.xlu0 %375
      %377 = vset.pattern.permute.xlu0 0
      %378 = vperm.xlu0 %377, %v355
      %v379 = vpop.permute.xlu0 %378
      %380 = vset.pattern.permute.xlu0 0
      %381 = vperm.xlu0 %380, %v356
      %v382 = vpop.permute.xlu0 %381
      %383 = vset.pattern.permute.xlu0 0
      %384 = vperm.xlu0 %383, %v357
      %v385 = vpop.permute.xlu0 %384
      %386 = vset.pattern.permute.xlu0 0
      %387 = vperm.xlu0 %386, %v358
      %v388 = vpop.permute.xlu0 %387
      %389 = vset.pattern.permute.xlu0 0
      %390 = vperm.xlu0 %389, %v359
      %v391 = vpop.permute.xlu0 %390
      %v392 = vlaneseq
      %v393 = vshrl.u32 %v392, 7
      %v394 = vsub.s32 %v288, %v393
      %v395 = vrot.slane %v370, %v394
      %v396 = vlaneseq
      %v397 = vshrl.u32 %v396, 7
      %v398 = vsub.s32 %v293, %v397
      %v399 = vrot.slane %v373, %v398
      %v400 = vsel %vm298, %v399, %v395
      %v401 = vlaneseq
      %v402 = vshrl.u32 %v401, 7
      %v403 = vsub.s32 %v300, %v402
      %v404 = vrot.slane %v376, %v403
      %v405 = vsel %vm305, %v404, %v400
      %v406 = vlaneseq
      %v407 = vshrl.u32 %v406, 7
      %v408 = vsub.s32 %v307, %v407
      %v409 = vrot.slane %v379, %v408
      %v410 = vsel %vm312, %v409, %v405
      %v411 = vlaneseq
      %v412 = vshrl.u32 %v411, 7
      %v413 = vsub.s32 %v288, %v412
      %v414 = vrot.slane %v382, %v413
      %v415 = vlaneseq
      %v416 = vshrl.u32 %v415, 7
      %v417 = vsub.s32 %v293, %v416
      %v418 = vrot.slane %v385, %v417
      %v419 = vsel %vm298, %v418, %v414
      %v420 = vlaneseq
      %v421 = vshrl.u32 %v420, 7
      %v422 = vsub.s32 %v300, %v421
      %v423 = vrot.slane %v388, %v422
      %v424 = vsel %vm305, %v423, %v419
      %v425 = vlaneseq
      %v426 = vshrl.u32 %v425, 7
      %v427 = vsub.s32 %v307, %v426
      %v428 = vrot.slane %v391, %v427
      %v429 = vsel %vm312, %v428, %v424
      %v430 = vsel %vm333, %v429, %v410
      %v432 = vadd.f32 %v336, %v430
      %vm433 = vcmask 254976
      %434 = vst.msk [vmem:[#allocation3] sm:$0x3] %vm433, %v432
      %v443 = vlaneseq
      %v444 = vshrl.u32 %v443, 7
      %v445 = vsub.s32 %v288, %v444
      %v446 = vrot.slane %v29, %v445
      %v447 = vlaneseq
      %v448 = vshrl.u32 %v447, 7
      %v449 = vsub.s32 %v293, %v448
      %v450 = vrot.slane %v32, %v449
      %v451 = vsel %vm298, %v450, %v446
      %v452 = vlaneseq
      %v453 = vshrl.u32 %v452, 7
      %v454 = vsub.s32 %v300, %v453
      %v455 = vrot.slane %v35, %v454
      %v456 = vsel %vm305, %v455, %v451
      %v457 = vlaneseq
      %v458 = vshrl.u32 %v457, 7
      %v459 = vsub.s32 %v307, %v458
      %v460 = vrot.slane %v38, %v459
      %v461 = vsel %vm312, %v460, %v456
      %v462 = vlaneseq
      %v463 = vshrl.u32 %v462, 7
      %v464 = vsub.s32 %v288, %v463
      %v465 = vrot.slane %v41, %v464
      %v466 = vlaneseq
      %v467 = vshrl.u32 %v466, 7
      %v468 = vsub.s32 %v293, %v467
      %v469 = vrot.slane %v44, %v468
      %v470 = vsel %vm298, %v469, %v465
      %v471 = vlaneseq
      %v472 = vshrl.u32 %v471, 7
      %v473 = vsub.s32 %v300, %v472
      %v474 = vrot.slane %v47, %v473
      %v475 = vsel %vm305, %v474, %v470
      %v476 = vlaneseq
      %v477 = vshrl.u32 %v476, 7
      %v478 = vsub.s32 %v307, %v477
      %v479 = vrot.slane %v50, %v478
      %v480 = vsel %vm312, %v479, %v475
      %v481 = vsel %vm333, %v480, %v461
      %v483 = vadd.f32 %v217, %v481
      %484 = vst.msk [vmem:[#allocation2] sm:$0x3] %vm433, %v483
    $region25: #{tpu_custom_call.1} parent=1 // pred_fallthru
      _
    // Predicated region
    $region26: #{tpu_custom_call.1} parent=1 // pred_check
      %p485 = pneg %p99
    $region27: #{tpu_custom_call.1} parent=1 // pred_check_branch
      %487 = sbr.rel (%p485) target = $region29
    $region28: #{tpu_custom_call.1} parent=1 // pred_region
      %v488 = vld [vmem:[#allocation2] sm:$0x3]
      %v489 = vmul.f32 %v488, 0.125
      %v490 = vld [vmem:[#allocation3] sm:$0x3]
      %v491 = vmul.f32 %v490, 0.14285715
      %v492 = vld [vmem:[%s1] sm:$0xff]
      %v493 = vld [vmem:[%s1 + $0x8] sm:$0xff]
      %v494 = vld [vmem:[%s1 + $0x10] sm:$0xff]
      %v495 = vld [vmem:[%s1 + $0x18] sm:$0xff]
      %v496 = vld [vmem:[%s2] sm:$0xff]
      %v497 = vld [vmem:[%s2 + $0x8] sm:$0xff]
      %v498 = vld [vmem:[%s2 + $0x10] sm:$0xff]
      %v499 = vld [vmem:[%s2 + $0x18] sm:$0xff]
      %vm500 = vcmask 261120
      %v502 = vsel %vm500, %v491, 0
      %504 = vmatprep.subr.mxu0 0.0
      %505 = vmatpush1.msra.mxu0 %v496
      %506 = vmatprep.subr.mxu0 0.0
      %507 = vmatpush1.msra.mxu0 %v497
      %508 = vmatprep.subr.mxu0 0.0
      %509 = vmatpush1.msra.mxu0 %v498
      %510 = vmatprep.subr.mxu0 0.0
      %511 = vmatpush1.msra.mxu0 %v499
      %512 = vmatprep.subr.mxu0 0.0
      %513 = vmatpush1.msra.mxu0 0.0
      %514 = vmatprep.subr.mxu0 0.0
      %515 = vmatpush1.msra.mxu0 0.0
      %516 = vmatprep.subr.mxu0 0.0
      %517 = vmatpush1.msra.mxu0 0.0
      %518 = vmatprep.subr.mxu0 0.0
      %519 = vmatpush1.msra.mxu0 0.0
      %520 = vmatprep.subr.mxu0 0.0
      %521 = vmatpush1.msra.mxu0 0.0
      %522 = vmatprep.subr.mxu0 0.0
      %523 = vmatpush1.msra.mxu0 0.0
      %524 = vmatprep.subr.mxu0 0.0
      %525 = vmatpush1.msra.mxu0 0.0
      %526 = vmatprep.subr.mxu0 0.0
      %527 = vmatpush1.msra.mxu0 0.0
      %528 = vmatprep.subr.mxu0 0.0
      %529 = vmatpush1.msra.mxu0 0.0
      %530 = vmatprep.subr.mxu0 0.0
      %531 = vmatpush1.msra.mxu0 0.0
      %532 = vmatprep.subr.mxu0 0.0
      %533 = vmatpush1.msra.mxu0 0.0
      %534 = vmatprep.subr.mxu0 0.0
      %535 = vmatpush1.msra.mxu0 0.0
      %536 = vmatprep.subr.mxu0 0.0
      %537 = vmatpush1.msra.mxu0 0.0
      %538 = vmatprep.subr.mxu0 0.0
      %539 = vmatpush1.msra.mxu0 0.0
      %540 = vmatprep.subr.mxu0 0.0
      %541 = vmatpush1.msra.mxu0 0.0
      %542 = vmatprep.subr.mxu0 0.0
      %543 = vmatpush1.msra.mxu0 0.0
      %544 = vmatprep.subr.mxu0 0.0
      %545 = vmatpush1.msra.mxu0 0.0
      %546 = vmatprep.subr.mxu0 0.0
      %547 = vmatpush1.msra.mxu0 0.0
      %548 = vmatprep.subr.mxu0 0.0
      %549 = vmatpush1.msra.mxu0 0.0
      %550 = vmatprep.subr.mxu0 0.0
      %551 = vmatpush1.msra.mxu0 0.0
      %552 = vmatprep.subr.mxu0 0.0
      %553 = vmatpush1.msra.mxu0 0.0
      %554 = vmatprep.subr.mxu0 0.0
      %555 = vmatpush1.msra.mxu0 0.0
      %556 = vmatprep.subr.mxu0 0.0
      %557 = vmatpush1.msra.mxu0 0.0
      %558 = vmatprep.subr.mxu0 0.0
      %559 = vmatpush1.msra.mxu0 0.0
      %560 = vmatprep.subr.mxu0 0.0
      %561 = vmatpush1.msra.mxu0 0.0
      %562 = vmatprep.subr.mxu0 0.0
      %563 = vmatpush1.msra.mxu0 0.0
      %564 = vmatprep.subr.mxu0 0.0
      %565 = vmatpush1.msra.mxu0 0.0
      %566 = vmatprep.subr.mxu0 0.0
      %567 = vmatpush1.msra.mxu0 0.0
      %568 = vmatprep.mubr.f32.mxu0 0.0
      %569 = vmatmul.mubr.f32.gmra.mrb[0].mxu0 %v502
      %v570 = vpop.f32.mrb[0].mxu0
      %v571 = vadd.f32 0.0, %v570
      %v572 = vpop.f32.mrb[0].mxu0
      %573 = vdwg.mxu0
      %v575 = vsel %vm500, %v489, 0
      %577 = vmatprep.subr.mxu0 0.0
      %578 = vmatpush1.msra.mxu0 %v492
      %579 = vmatprep.subr.mxu0 0.0
      %580 = vmatpush1.msra.mxu0 %v493
      %581 = vmatprep.subr.mxu0 0.0
      %582 = vmatpush1.msra.mxu0 %v494
      %583 = vmatprep.subr.mxu0 0.0
      %584 = vmatpush1.msra.mxu0 %v495
      %585 = vmatprep.subr.mxu0 0.0
      %586 = vmatpush1.msra.mxu0 0.0
      %587 = vmatprep.subr.mxu0 0.0
      %588 = vmatpush1.msra.mxu0 0.0
      %589 = vmatprep.subr.mxu0 0.0
      %590 = vmatpush1.msra.mxu0 0.0
      %591 = vmatprep.subr.mxu0 0.0
      %592 = vmatpush1.msra.mxu0 0.0
      %593 = vmatprep.subr.mxu0 0.0
      %594 = vmatpush1.msra.mxu0 0.0
      %595 = vmatprep.subr.mxu0 0.0
      %596 = vmatpush1.msra.mxu0 0.0
      %597 = vmatprep.subr.mxu0 0.0
      %598 = vmatpush1.msra.mxu0 0.0
      %599 = vmatprep.subr.mxu0 0.0
      %600 = vmatpush1.msra.mxu0 0.0
      %601 = vmatprep.subr.mxu0 0.0
      %602 = vmatpush1.msra.mxu0 0.0
      %603 = vmatprep.subr.mxu0 0.0
      %604 = vmatpush1.msra.mxu0 0.0
      %605 = vmatprep.subr.mxu0 0.0
      %606 = vmatpush1.msra.mxu0 0.0
      %607 = vmatprep.subr.mxu0 0.0
      %608 = vmatpush1.msra.mxu0 0.0
      %609 = vmatprep.subr.mxu0 0.0
      %610 = vmatpush1.msra.mxu0 0.0
      %611 = vmatprep.subr.mxu0 0.0
      %612 = vmatpush1.msra.mxu0 0.0
      %613 = vmatprep.subr.mxu0 0.0
      %614 = vmatpush1.msra.mxu0 0.0
      %615 = vmatprep.subr.mxu0 0.0
      %616 = vmatpush1.msra.mxu0 0.0
      %617 = vmatprep.subr.mxu0 0.0
      %618 = vmatpush1.msra.mxu0 0.0
      %619 = vmatprep.subr.mxu0 0.0
      %620 = vmatpush1.msra.mxu0 0.0
      %621 = vmatprep.subr.mxu0 0.0
      %622 = vmatpush1.msra.mxu0 0.0
      %623 = vmatprep.subr.mxu0 0.0
      %624 = vmatpush1.msra.mxu0 0.0
      %625 = vmatprep.subr.mxu0 0.0
      %626 = vmatpush1.msra.mxu0 0.0
      %627 = vmatprep.subr.mxu0 0.0
      %628 = vmatpush1.msra.mxu0 0.0
      %629 = vmatprep.subr.mxu0 0.0
      %630 = vmatpush1.msra.mxu0 0.0
      %631 = vmatprep.subr.mxu0 0.0
      %632 = vmatpush1.msra.mxu0 0.0
      %633 = vmatprep.subr.mxu0 0.0
      %634 = vmatpush1.msra.mxu0 0.0
      %635 = vmatprep.subr.mxu0 0.0
      %636 = vmatpush1.msra.mxu0 0.0
      %637 = vmatprep.subr.mxu0 0.0
      %638 = vmatpush1.msra.mxu0 0.0
      %639 = vmatprep.subr.mxu0 0.0
      %640 = vmatpush1.msra.mxu0 0.0
      %641 = vmatprep.mubr.f32.mxu0 0.0
      %642 = vmatmul.mubr.f32.gmra.mrb[0].mxu0 %v575
      %v643 = vpop.f32.mrb[0].mxu0
      %v644 = vadd.f32 %v571, %v643
      %v645 = vpop.f32.mrb[0].mxu0
      %646 = vdwg.mxu0
      %v647 = vld [vmem:[%s3] sm:$0x1]
      %v649 = vlaneseq
      %v650 = vshrl.u32 %v649, 7
      %v651 = vsub.s32 0, %v650
      %v652 = vrot.slane %v647, %v651
      %v654 = vadd.f32 %v644, %v652
      %vm655 = vcmask 17408
      %656 = vst.msk [vmem:[#allocation4] sm:$0x3] %vm655, %v654
    $region29: #{tpu_custom_call.1} parent=1 // pred_fallthru
      _
    // Predicated region
    $region30: #{tpu_custom_call.1} parent=1 // pred_check
      _
    $region31: #{tpu_custom_call.1} parent=1 // pred_check_branch
      %658 = sbr.rel (0) target = $region33
    $region32: #{tpu_custom_call.1} parent=1 // pred_region
      %s660 = ssub.s32 32, 32
      %661 = vsyncadd [#allocation5], %s660
      %s663 = sshll.u32 [#allocation4], 4
      %s664 = int_to_ptr.vmem [resolvable:$true] %s663
      %666 = dma.vmem_to_hbm [thread:$0]  %s664, 32, %s4, [#allocation5]
    $region33: #{tpu_custom_call.1} parent=1 // pred_fallthru
      _
    // Predicated region
    $region34: #{tpu_custom_call.1} parent=1 // pred_check
      _
    $region35: #{tpu_custom_call.1} parent=1 // pred_check_branch
      %668 = sbr.rel (0) target = $region37
    $region36: #{tpu_custom_call.1} parent=1 // pred_region
      %669 = dma.done [#allocation5], 32
    $region37: #{tpu_custom_call.1} parent=1 // pred_fallthru
      _
    %670 = vsyncpa [#allocation5], 1

</llo_original>
